<compile_context>
chip_gen: v7x
topology: tpu7x:2x2x1
jax: 0.10.0
libtpu: 0.0.40
codegen_flags: <defaults>
</compile_context>

<pallas_src>
import jax
import jax.numpy as jnp
from jax.experimental import pallas as pl
from jax.experimental.pallas import tpu as pltpu


def _round_up(x, m):
    return (x + m - 1) // m * m


# --------------------------------------------------------------------------
# Kernel
# --------------------------------------------------------------------------
def fcq_kernel(s_ref,      # [block_b, state_dim]  f32
               w1_ref,     # [state_dim, 2H]       bf16   (q1 | i1)
               w2_ref,     # [H, 2H]               bf16   (q2 | i2)
               w3_ref,     # [2, H, A]             bf16   (q3 , i3)
               b_ref,      # [1, 4H + 2*Apad]      f32    (q1b|i1b|q2b|i2b|q3b..|i3b..)
               out_ref):   # [block_b, pad_cols]   f32    packed [q | logp | i | 0]
    f32 = jnp.float32
    bf16 = jnp.bfloat16
    H = w2_ref.shape[0]
    A = w3_ref.shape[2]
    apad = (b_ref.shape[1] - 4 * H) // 2

    x = s_ref[...].astype(bf16)

    # ---- fused layer 1: one MXU pass feeds both branches ----
    h1 = jnp.dot(x, w1_ref[...], preferred_element_type=f32) + b_ref[:, 0:2 * H]
    h1 = jnp.maximum(h1, 0.0)
    qh = h1[:, :H].astype(bf16)   # 128-aligned split -> free slices
    ih = h1[:, H:].astype(bf16)

    # ---- layer 2 (separate matmuls over the fused weight; 128-aligned slices) ----
    q = jnp.dot(qh, w2_ref[:, :H], preferred_element_type=f32) + b_ref[:, 2 * H:3 * H]
    i = jnp.dot(ih, w2_ref[:, H:], preferred_element_type=f32) + b_ref[:, 3 * H:4 * H]
    q = jnp.maximum(q, 0.0).astype(bf16)
    i = jnp.maximum(i, 0.0).astype(bf16)

    # ---- layer 3: q3 (no relu), i3 (relu) ----
    q = jnp.dot(q, w3_ref[0], preferred_element_type=f32) + b_ref[:, 4 * H:4 * H + A]
    i = jnp.dot(i, w3_ref[1], preferred_element_type=f32) + b_ref[:, 4 * H + apad:4 * H + apad + A]
    i = jnp.maximum(i, 0.0)

    # ---- log_softmax(i, axis=1), numerically stable, f32 ----
    m = jnp.max(i, axis=-1, keepdims=True)
    shifted = i - m
    lse = jnp.log(jnp.sum(jnp.exp(shifted), axis=-1, keepdims=True))
    logp = shifted - lse

    # ---- single lane-dense packed store: [ q | logp | i | zero-pad ] ----
    pieces = [q, logp, i]
    pad = out_ref.shape[1] - 3 * A
    if pad > 0:
        pieces.append(jnp.zeros((q.shape[0], pad), f32))
    out_ref[...] = jnp.concatenate(pieces, axis=-1).astype(out_ref.dtype)


# --------------------------------------------------------------------------
# One-time parameter fusion (hoisted out of the hot path)
# --------------------------------------------------------------------------
def fuse_params(params):
    """Preprocess f32 [in, out] weights / [1, out] biases into the fused bf16/f32
    tiles the kernel consumes.  Call ONCE after init / whenever params change,
    never per forward."""
    S = params["q1w"].shape[0]
    H = params["q2w"].shape[0]
    A = params["q3w"].shape[1]
    apad = _round_up(A, 128)

    bf = lambda w: w.astype(jnp.bfloat16)
    w1 = bf(jnp.concatenate([params["q1w"], params["i1w"]], axis=1))   # [S, 2H]
    w2 = bf(jnp.concatenate([params["q2w"], params["i2w"]], axis=1))   # [H, 2H]
    w3 = bf(jnp.stack([params["q3w"], params["i3w"]], axis=0))         # [2, H, A]

    zpad = jnp.zeros((1, apad - A), jnp.float32)
    bias = jnp.concatenate(
        [params["q1b"], params["i1b"],      # [1, 2H]   offset 0
         params["q2b"],                     # [1, H]    offset 2H
         params["i2b"],                     # [1, H]    offset 3H
         params["q3b"], zpad,               # [1, apad] offset 4H
         params["i3b"], zpad],              # [1, apad] offset 4H+apad
        axis=1)                             # all slice offsets 128-aligned

    return dict(w1=w1, w2=w2, w3=w3, bias=bias,
                state_dim=S, hidden=H, num_actions=A)


# --------------------------------------------------------------------------
# Forward wrapper
# --------------------------------------------------------------------------
def _default_block_b(B):
    if B <= 8:
        return B
    # Prefer >= 2 grid steps (v7x megacore sharding of the "parallel" batch
    # axis) with a multiple-of-8 tile, capped at 512 rows so the in-body f32
    # temporaries + double-buffered in/out tiles stay well inside v5e's
    # 16 MiB scoped-VMEM default (also fine for v7x's 64 MiB physical VMEM).
    for cand in (512, 256, 128, 64, 32, 16, 8):
        if cand < B and B % cand == 0:
            return cand
    return B


def fc_q_forward(state, fused, *, block_b=None):
    """Fused FC_Q forward.  `fused` comes from fuse_params()."""
    B, state_dim = state.shape
    assert state_dim == fused["state_dim"]
    H = fused["hidden"]
    A = fused["num_actions"]

    if block_b is None:
        block_b = _default_block_b(B)
    else:
        # (8,128) BlockSpec constraint: sub-full-array batch blocks must be a
        # multiple of 8 and must tile B exactly.
        assert block_b == B or (B % block_b == 0 and block_b % 8 == 0), \
            "block_b must equal B, or divide B and be a multiple of 8"

    pad_cols = max(128, _round_up(3 * A, 128))
    bias_cols = fused["bias"].shape[1]

    def resident2(shape):
        return pl.BlockSpec(shape, lambda b: (0, 0))

    in_specs = [
        pl.BlockSpec((block_b, state_dim), lambda b: (b, 0)),       # state
        resident2((state_dim, 2 * H)),                              # w1 (q1|i1)
        resident2((H, 2 * H)),                                      # w2 (q2|i2)
        pl.BlockSpec((2, H, A), lambda b: (0, 0, 0)),               # w3 (q3,i3)
        resident2((1, bias_cols)),                                  # fused biases
    ]
    out_spec = pl.BlockSpec((block_b, pad_cols), lambda b: (b, 0))

    # Advisory cost model: tiny-FLOP, weight-DMA / launch-bound custom call.
    flops = 2 * B * (state_dim * 2 * H + 2 * H * H + 2 * H * A)
    weight_bytes = (state_dim * 2 * H + 2 * H * H + 2 * H * A) * 2   # bf16
    bias_bytes = bias_cols * 4
    io_bytes = B * state_dim * 4 + B * pad_cols * 4
    cost = pl.CostEstimate(flops=flops,
                           transcendentals=B * (A + 1),
                           bytes_accessed=weight_bytes + bias_bytes + io_bytes)

    packed = pl.pallas_call(
        fcq_kernel,
        out_shape=jax.ShapeDtypeStruct((B, pad_cols), jnp.float32),
        grid_spec=pltpu.PrefetchScalarGridSpec(
            num_scalar_prefetch=0,
            grid=(B // block_b,),
            in_specs=in_specs,
            out_specs=out_spec,
        ),
        compiler_params=pltpu.CompilerParams(
            dimension_semantics=("parallel",)),
        cost_estimate=cost,
    )(state, fused["w1"], fused["w2"], fused["w3"], fused["bias"])

    q_out = packed[:, 0:A]
    logp_out = packed[:, A:2 * A]
    i_out = packed[:, 2 * A:3 * A]
    return q_out, logp_out, i_out


# --------------------------------------------------------------------------
# Init + pure-JAX reference
# --------------------------------------------------------------------------
def init_params(key, state_dim, num_actions, hidden=256):
    """Deterministic init mimicking PyTorch nn.Linear defaults (U[-1/sqrt(fan_in), +])."""
    keys = jax.random.split(key, 12)

    def linear(kw, kb, fan_in, fan_out):
        bound = 1.0 / jnp.sqrt(jnp.float32(fan_in))
        # Stored pre-transposed as [in, out]; bias as [1, out].
        w = jax.random.uniform(kw, (fan_in, fan_out), jnp.float32, -bound, bound)
        b = jax.random.uniform(kb, (1, fan_out), jnp.float32, -bound, bound)
        return w, b

    q1w, q1b = linear(keys[0], keys[1], state_dim, hidden)
    q2w, q2b = linear(keys[2], keys[3], hidden, hidden)
    q3w, q3b = linear(keys[4], keys[5], hidden, num_actions)
    i1w, i1b = linear(keys[6], keys[7], state_dim, hidden)
    i2w, i2b = linear(keys[8], keys[9], hidden, hidden)
    i3w, i3b = linear(keys[10], keys[11], hidden, num_actions)
    return dict(q1w=q1w, q1b=q1b, q2w=q2w, q2b=q2b, q3w=q3w, q3b=q3b,
                i1w=i1w, i1b=i1b, i2w=i2w, i2b=i2b, i3w=i3w, i3b=i3b)


def fc_q_reference(state, p):
    """Pure-JAX reference using the same bf16 weight/activation quantization."""
    f32 = jnp.float32
    bf = lambda x: x.astype(jnp.bfloat16).astype(f32)
    relu = lambda x: jnp.maximum(x, 0.0)
    lin = lambda x, w, b: jnp.dot(bf(x), bf(w)) + b

    q = relu(lin(state, p["q1w"], p["q1b"]))
    q = relu(lin(q, p["q2w"], p["q2b"]))
    q_out = lin(q, p["q3w"], p["q3b"])

    i = relu(lin(state, p["i1w"], p["i1b"]))
    i = relu(lin(i, p["i2w"], p["i2b"]))
    i = relu(lin(i, p["i3w"], p["i3b"]))
    logp = jax.nn.log_softmax(i, axis=1)
    return q_out, logp, i


if __name__ == "__main__":
    state_dim, num_actions = 16, 8
    key = jax.random.PRNGKey(0)
    k_state, k_params = jax.random.split(key)

    params = init_params(k_params, state_dim, num_actions)
    fused = fuse_params(params)            # one-time fusion, outside the hot path
    jax.block_until_ready(fused["w1"])

    # B=8: single grid step.  B=32: multi-step grid exercises the block_b /
    # "parallel" batch-axis path (2+ steps for v7x megacore).
    for B in (8, 32):
        state = jax.random.normal(jax.random.fold_in(k_state, B),
                                  (B, state_dim), jnp.float32)

        q_out, logp_out, i_out = fc_q_forward(state, fused)
        jax.block_until_ready((q_out, logp_out, i_out))

        q_ref, logp_ref, i_ref = fc_q_reference(state, params)
        assert jnp.allclose(q_out, q_ref, atol=2e-3, rtol=2e-3)
        assert jnp.allclose(logp_out, logp_ref, atol=2e-3, rtol=2e-3)
        assert jnp.allclose(i_out, i_ref, atol=2e-3, rtol=2e-3)

    print("KERNEL_OK")
</pallas_src>

<mosaic_0001>
module attributes {stable_mosaic.version = 11 : i64} {
  func.func @fcq_kernel(%arg0: i32, %arg1: memref<8x16xf32, #tpu.memory_space<vmem>>, %arg2: memref<16x512xbf16, #tpu.memory_space<vmem>>, %arg3: memref<256x512xbf16, #tpu.memory_space<vmem>>, %arg4: memref<2x256x8xbf16, #tpu.memory_space<vmem>>, %arg5: memref<1x1280xf32, #tpu.memory_space<vmem>>, %arg6: memref<8x128xf32, #tpu.memory_space<vmem>>) attributes {dimension_semantics = [#tpu.dimension_semantics<parallel>], iteration_bounds = array<i64: 1>, scalar_prefetch = 0 : i64, scratch_operands = 0 : i64, tpu.core_type = #tpu.core_type<tc>, window_params = [{transform_indices = @transform_0, window_bounds = array<i64: 8, 16>}, {pipeline_mode = #tpu.pipeline_mode<synchronous>, transform_indices = @transform_1, window_bounds = array<i64: 16, 512>}, {pipeline_mode = #tpu.pipeline_mode<synchronous>, transform_indices = @transform_2, window_bounds = array<i64: 256, 512>}, {pipeline_mode = #tpu.pipeline_mode<synchronous>, transform_indices = @transform_3, window_bounds = array<i64: 2, 256, 8>}, {pipeline_mode = #tpu.pipeline_mode<synchronous>, transform_indices = @transform_4, window_bounds = array<i64: 1, 1280>}, {transform_indices = @transform_5, window_bounds = array<i64: 8, 128>}]} {
    %c0 = arith.constant 0 : index
    %c0_0 = arith.constant 0 : index
    %0 = vector.load %arg1[%c0, %c0_0] : memref<8x16xf32, #tpu.memory_space<vmem>>, vector<8x16xf32>
    %1 = arith.truncf %0 : vector<8x16xf32> to vector<8x16xbf16>
    %c0_1 = arith.constant 0 : index
    %c0_2 = arith.constant 0 : index
    %2 = vector.load %arg2[%c0_1, %c0_2] : memref<16x512xbf16, #tpu.memory_space<vmem>>, vector<16x512xbf16>
    %cst = arith.constant dense<0.000000e+00> : vector<8x512xf32>
    %3 = tpu.matmul %1, %2, %cst {dimension_numbers = #tpu.dot_dimension_numbers<[1], [0], [0], [1], [0, 0, 1, 1], [], []>} : vector<8x16xbf16>, vector<16x512xbf16>, vector<8x512xf32> -> vector<8x512xf32>
    %c0_3 = arith.constant 0 : index
    %c0_4 = arith.constant 0 : index
    %4 = vector.load %arg5[%c0_3, %c0_4] : memref<1x1280xf32, #tpu.memory_space<vmem>>, vector<1x512xf32>
    %5 = vector.broadcast %4 : vector<1x512xf32> to vector<8x512xf32>
    %6 = arith.addf %3, %5 : vector<8x512xf32>
    %cst_5 = arith.constant 0.000000e+00 : f32
    %7 = vector.broadcast %cst_5 : f32 to vector<8x512xf32>
    %8 = arith.maximumf %6, %7 : vector<8x512xf32>
    %9 = vector.extract_strided_slice %8 {offsets = [0, 0], sizes = [8, 256], strides = [1, 1]} : vector<8x512xf32> to vector<8x256xf32>
    %10 = arith.truncf %9 : vector<8x256xf32> to vector<8x256xbf16>
    %11 = vector.extract_strided_slice %8 {offsets = [0, 256], sizes = [8, 256], strides = [1, 1]} : vector<8x512xf32> to vector<8x256xf32>
    %12 = arith.truncf %11 : vector<8x256xf32> to vector<8x256xbf16>
    %c0_6 = arith.constant 0 : index
    %c0_7 = arith.constant 0 : index
    %13 = vector.load %arg3[%c0_6, %c0_7] : memref<256x512xbf16, #tpu.memory_space<vmem>>, vector<256x256xbf16>
    %cst_8 = arith.constant dense<0.000000e+00> : vector<8x256xf32>
    %14 = tpu.matmul %10, %13, %cst_8 {dimension_numbers = #tpu.dot_dimension_numbers<[1], [0], [0], [1], [0, 0, 1, 1], [], []>} : vector<8x256xbf16>, vector<256x256xbf16>, vector<8x256xf32> -> vector<8x256xf32>
    %c0_9 = arith.constant 0 : index
    %c512 = arith.constant 512 : index
    %15 = vector.load %arg5[%c0_9, %c512] : memref<1x1280xf32, #tpu.memory_space<vmem>>, vector<1x256xf32>
    %16 = vector.broadcast %15 : vector<1x256xf32> to vector<8x256xf32>
    %17 = arith.addf %14, %16 : vector<8x256xf32>
    %c0_10 = arith.constant 0 : index
    %c256 = arith.constant 256 : index
    %18 = vector.load %arg3[%c0_10, %c256] : memref<256x512xbf16, #tpu.memory_space<vmem>>, vector<256x256xbf16>
    %cst_11 = arith.constant dense<0.000000e+00> : vector<8x256xf32>
    %19 = tpu.matmul %12, %18, %cst_11 {dimension_numbers = #tpu.dot_dimension_numbers<[1], [0], [0], [1], [0, 0, 1, 1], [], []>} : vector<8x256xbf16>, vector<256x256xbf16>, vector<8x256xf32> -> vector<8x256xf32>
    %c0_12 = arith.constant 0 : index
    %c768 = arith.constant 768 : index
    %20 = vector.load %arg5[%c0_12, %c768] : memref<1x1280xf32, #tpu.memory_space<vmem>>, vector<1x256xf32>
    %21 = vector.broadcast %20 : vector<1x256xf32> to vector<8x256xf32>
    %22 = arith.addf %19, %21 : vector<8x256xf32>
    %cst_13 = arith.constant 0.000000e+00 : f32
    %23 = vector.broadcast %cst_13 : f32 to vector<8x256xf32>
    %24 = arith.maximumf %17, %23 : vector<8x256xf32>
    %25 = arith.truncf %24 : vector<8x256xf32> to vector<8x256xbf16>
    %cst_14 = arith.constant 0.000000e+00 : f32
    %26 = vector.broadcast %cst_14 : f32 to vector<8x256xf32>
    %27 = arith.maximumf %22, %26 : vector<8x256xf32>
    %28 = arith.truncf %27 : vector<8x256xf32> to vector<8x256xbf16>
    %c0_15 = arith.constant 0 : index
    %c0_16 = arith.constant 0 : index
    %c0_17 = arith.constant 0 : index
    %29 = vector.load %arg4[%c0_15, %c0_16, %c0_17] : memref<2x256x8xbf16, #tpu.memory_space<vmem>>, vector<1x256x8xbf16>
    %30 = vector.shape_cast %29 : vector<1x256x8xbf16> to vector<256x8xbf16>
    %cst_18 = arith.constant dense<0.000000e+00> : vector<8x8xf32>
    %31 = tpu.matmul %25, %30, %cst_18 {dimension_numbers = #tpu.dot_dimension_numbers<[1], [0], [0], [1], [0, 0, 1, 1], [], []>} : vector<8x256xbf16>, vector<256x8xbf16>, vector<8x8xf32> -> vector<8x8xf32>
    %c0_19 = arith.constant 0 : index
    %c1024 = arith.constant 1024 : index
    %32 = vector.load %arg5[%c0_19, %c1024] : memref<1x1280xf32, #tpu.memory_space<vmem>>, vector<1x8xf32>
    %33 = vector.broadcast %32 : vector<1x8xf32> to vector<8x8xf32>
    %34 = arith.addf %31, %33 : vector<8x8xf32>
    %c1 = arith.constant 1 : index
    %c0_20 = arith.constant 0 : index
    %c0_21 = arith.constant 0 : index
    %35 = vector.load %arg4[%c1, %c0_20, %c0_21] : memref<2x256x8xbf16, #tpu.memory_space<vmem>>, vector<1x256x8xbf16>
    %36 = vector.shape_cast %35 : vector<1x256x8xbf16> to vector<256x8xbf16>
    %cst_22 = arith.constant dense<0.000000e+00> : vector<8x8xf32>
    %37 = tpu.matmul %28, %36, %cst_22 {dimension_numbers = #tpu.dot_dimension_numbers<[1], [0], [0], [1], [0, 0, 1, 1], [], []>} : vector<8x256xbf16>, vector<256x8xbf16>, vector<8x8xf32> -> vector<8x8xf32>
    %c0_23 = arith.constant 0 : index
    %c1152 = arith.constant 1152 : index
    %38 = vector.load %arg5[%c0_23, %c1152] : memref<1x1280xf32, #tpu.memory_space<vmem>>, vector<1x8xf32>
    %39 = vector.broadcast %38 : vector<1x8xf32> to vector<8x8xf32>
    %40 = arith.addf %37, %39 : vector<8x8xf32>
    %cst_24 = arith.constant 0.000000e+00 : f32
    %41 = vector.broadcast %cst_24 : f32 to vector<8x8xf32>
    %42 = arith.maximumf %40, %41 : vector<8x8xf32>
    %cst_25 = arith.constant dense<0xFF800000> : vector<8xf32>
    %43 = vector.multi_reduction <maximumf>, %42, %cst_25 [1] : vector<8x8xf32> to vector<8xf32>
    %44 = vector.shape_cast %43 : vector<8xf32> to vector<8x1xf32>
    %45 = vector.broadcast %44 : vector<8x1xf32> to vector<8x8xf32>
    %46 = arith.subf %42, %45 : vector<8x8xf32>
    %47 = math.exp %46 : vector<8x8xf32>
    %cst_26 = arith.constant dense<0.000000e+00> : vector<8xf32>
    %48 = vector.multi_reduction <add>, %47, %cst_26 [1] : vector<8x8xf32> to vector<8xf32>
    %49 = vector.shape_cast %48 : vector<8xf32> to vector<8x1xf32>
    %50 = math.log %49 : vector<8x1xf32>
    %51 = vector.broadcast %50 : vector<8x1xf32> to vector<8x8xf32>
    %52 = arith.subf %46, %51 : vector<8x8xf32>
    %cst_27 = arith.constant 0.000000e+00 : f32
    %53 = vector.broadcast %cst_27 : f32 to vector<8x104xf32>
    %54 = tpu.concatenate %34, %52, %42, %53 in 1 : vector<8x8xf32>, vector<8x8xf32>, vector<8x8xf32>, vector<8x104xf32> -> vector<8x128xf32>
    %c0_28 = arith.constant 0 : index
    %c0_29 = arith.constant 0 : index
    %55 = vector.load %arg6[%c0_28, %c0_29] : memref<8x128xf32, #tpu.memory_space<vmem>>, vector<8x128xf32>
    tpu.vector_store %arg6[%c0_28, %c0_29], %54 {strides = array<i32>} : memref<8x128xf32, #tpu.memory_space<vmem>>, vector<8x128xf32>,
    return
  }
  func.func @transform_0(%arg0: i32) -> (i32, i32) {
    %c0_i32 = arith.constant 0 : i32
    %c0_i32_0 = arith.constant 0 : i32
    return %arg0, %c0_i32 : i32, i32
  }
  func.func @transform_1(%arg0: i32) -> (i32, i32) {
    %c0_i32 = arith.constant 0 : i32
    %c0_i32_0 = arith.constant 0 : i32
    %c0_i32_1 = arith.constant 0 : i32
    return %c0_i32, %c0_i32_0 : i32, i32
  }
  func.func @transform_2(%arg0: i32) -> (i32, i32) {
    %c0_i32 = arith.constant 0 : i32
    %c0_i32_0 = arith.constant 0 : i32
    %c0_i32_1 = arith.constant 0 : i32
    return %c0_i32, %c0_i32_0 : i32, i32
  }
  func.func @transform_3(%arg0: i32) -> (i32, i32, i32) {
    %c0_i32 = arith.constant 0 : i32
    %c0_i32_0 = arith.constant 0 : i32
    %c0_i32_1 = arith.constant 0 : i32
    %c0_i32_2 = arith.constant 0 : i32
    return %c0_i32, %c0_i32_0, %c0_i32_1 : i32, i32, i32
  }
  func.func @transform_4(%arg0: i32) -> (i32, i32) {
    %c0_i32 = arith.constant 0 : i32
    %c0_i32_0 = arith.constant 0 : i32
    %c0_i32_1 = arith.constant 0 : i32
    return %c0_i32, %c0_i32_0 : i32, i32
  }
  func.func @transform_5(%arg0: i32) -> (i32, i32) {
    %c0_i32 = arith.constant 0 : i32
    %c0_i32_0 = arith.constant 0 : i32
    return %arg0, %c0_i32 : i32, i32
  }
}

</mosaic_0001>

<llo_original>
// kernel: tpu_custom_call.1
$region0: #{tpu_custom_call.1}
  #allocation0 [shape = 'u32[]', space=smem, size = 0x4, offset = 0x4, fixed_abs, tag = 'smem constant byte address 0x4 - core index']
  #allocation1 [shape = 'u32[144,128]{1,0:T(1,128)}', space=vmem, size = 0x12000, scoped, tag = 'internal scratch']
  %s0 = inlined_call_operand.vmem [shape: f32[8,16], index: 0, kind: input, shape index: {}]
  %s1 = inlined_call_operand.vmem [shape: bf16[16,512], index: 1, kind: input, shape index: {}]
  %s2 = inlined_call_operand.hbm [shape: bf16[256,512], index: 2, kind: input, shape index: {}]
  %s3 = inlined_call_operand.vmem [shape: bf16[2,256,8], index: 3, kind: input, shape index: {}]
  %s4 = inlined_call_operand.vmem [shape: f32[1,1280], index: 4, kind: input, shape index: {}]
  %s5 = inlined_call_operand.hbm [shape: f32[8,128], index: 5, kind: output, shape index: {}]
  %s6 = sld [smem:[#allocation0]]
  $region34: #{tpu_custom_call.1} parent=0
    _
  %s8 = ssub.s32 1, %s6
  %s9 = scalar_select 0, %s8, %s6
  $region1: #{tpu_custom_call.1} parent=0
    #allocation2 [shape = 'u8[262144]{0}', space=vmem, size = 0x40000, scoped, tag = 'input window, operand 2, single buffered']
    #allocation3 [shape = 's32[1]{0}', space=sflag, size = 0x4, scoped, tag = 'scoped memory for tpu_custom_call.1']
    #allocation4 [shape = 's32[1]{0}', space=sflag, size = 0x4, scoped, tag = 'scoped memory for tpu_custom_call.1']
    #allocation5 [shape = 'u8[4096]{0}', space=vmem, size = 0x1000, scoped, tag = 'output window, operand 0, single buffered']
    %10 = vsyncpa [#allocation3], 0
    %11 = vsyncpa [#allocation4], 0
    // Predicated region
    $region2: #{tpu_custom_call.1} parent=1 // pred_check
      _
    $region3: #{tpu_custom_call.1} parent=1 // pred_check_branch
      %13 = sbr.rel (0) target = $region5
    $region4: #{tpu_custom_call.1} parent=1 // pred_region
      _
    $region5: #{tpu_custom_call.1} parent=1 // pred_fallthru
      _
    // Predicated region
    $region6: #{tpu_custom_call.1} parent=1 // pred_check
      _
    $region7: #{tpu_custom_call.1} parent=1 // pred_check_branch
      %15 = sbr.rel (0) target = $region9
    $region8: #{tpu_custom_call.1} parent=1 // pred_region
      _
    $region9: #{tpu_custom_call.1} parent=1 // pred_fallthru
      _
    // Predicated region
    $region10: #{tpu_custom_call.1} parent=1 // pred_check
      _
    $region11: #{tpu_custom_call.1} parent=1 // pred_check_branch
      %17 = sbr.rel (0) target = $region13
    $region12: #{tpu_custom_call.1} parent=1 // pred_region
      %s19 = ssub.s32 8192, 8192
      %20 = vsyncadd [#allocation3], %s19
      %s21 = sshll.u32 [#allocation2], 4
      %s22 = int_to_ptr.vmem [resolvable:$true] %s21
      %27 = dma.hbm_to_vmem [thread:$0]  %s2, 8192, %s22, [#allocation3], 256, 256, 16
    $region13: #{tpu_custom_call.1} parent=1 // pred_fallthru
      _
    // Predicated region
    $region14: #{tpu_custom_call.1} parent=1 // pred_check
      _
    $region15: #{tpu_custom_call.1} parent=1 // pred_check_branch
      %29 = sbr.rel (0) target = $region17
    $region16: #{tpu_custom_call.1} parent=1 // pred_region
      _
    $region17: #{tpu_custom_call.1} parent=1 // pred_fallthru
      _
    // Predicated region
    $region18: #{tpu_custom_call.1} parent=1 // pred_check
      _
    $region19: #{tpu_custom_call.1} parent=1 // pred_check_branch
      %31 = sbr.rel (0) target = $region21
    $region20: #{tpu_custom_call.1} parent=1 // pred_region
      _
    $region21: #{tpu_custom_call.1} parent=1 // pred_fallthru
      _
    // Predicated region
    $region22: #{tpu_custom_call.1} parent=1 // pred_check
      _
    $region23: #{tpu_custom_call.1} parent=1 // pred_check_branch
      %33 = sbr.rel (0) target = $region25
    $region24: #{tpu_custom_call.1} parent=1 // pred_region
      %34 = dma.done [#allocation3], 8192
    $region25: #{tpu_custom_call.1} parent=1 // pred_fallthru
      _
    %v36 = vld [vmem:[%s0] sm:$0xff]
    %v37 = vpack.c.bf16 %v36, %v36
    %v38 = vld [vmem:[%s1] sm:$0xff]
    %v39 = vld [vmem:[%s1 + $0x8] sm:$0xff]
    %v40 = vld [vmem:[%s1 + $0x10] sm:$0xff]
    %v41 = vld [vmem:[%s1 + $0x18] sm:$0xff]
    %v42 = vld [vmem:[%s4] sm:$0xf]
    %v44 = vlaneseq
    %v45 = vshrl.u32 %v44, 7
    %v46 = vsub.s32 0, %v45
    %v47 = vrot.slane %v42, %v46
    %v48 = vlaneseq
    %v49 = vshrl.u32 %v48, 7
    %v50 = vsub.s32 1, %v49
    %v51 = vrot.slane %v42, %v50
    %v52 = vlaneseq
    %v53 = vshrl.u32 %v52, 7
    %v54 = vsub.s32 2, %v53
    %v55 = vrot.slane %v42, %v54
    %v56 = vlaneseq
    %v57 = vshrl.u32 %v56, 7
    %v58 = vsub.s32 3, %v57
    %v59 = vrot.slane %v42, %v58
    %v68 = vunpack.c.l.b16 %v38
    %v69 = vunpack.c.h.b16 %v38
    %v70 = vunpack.c.l.b16 %v39
    %v71 = vunpack.c.h.b16 %v39
    %v72 = vunpack.c.l.b16 %v40
    %v73 = vunpack.c.h.b16 %v40
    %v74 = vunpack.c.l.b16 %v41
    %v75 = vunpack.c.h.b16 %v41
    %v76 = vpack.c.b16 %v72, %v68
    %v77 = vpack.c.b16 %v73, %v69
    %v78 = vpack.c.b16 %v74, %v70
    %v79 = vpack.c.b16 %v75, %v71
    %vm84 = vcmask 130048
    %v86 = vsel %vm84, %v37, 0
    %88 = vmatprep.subr.bf16.mxu0 %v77
    %89 = vmatpush1.bf16.msra.mxu0 %v76
    %90 = vmatprep.subr.bf16.mxu0 0
    %91 = vmatpush1.bf16.msra.mxu0 0
    %92 = vmatprep.subr.bf16.mxu0 0
    %93 = vmatpush1.bf16.msra.mxu0 0
    %94 = vmatprep.subr.bf16.mxu0 0
    %95 = vmatpush1.bf16.msra.mxu0 0
    %96 = vmatprep.subr.bf16.mxu0 0
    %97 = vmatpush1.bf16.msra.mxu0 0
    %98 = vmatprep.subr.bf16.mxu0 0
    %99 = vmatpush1.bf16.msra.mxu0 0
    %100 = vmatprep.subr.bf16.mxu0 0
    %101 = vmatpush1.bf16.msra.mxu0 0
    %102 = vmatprep.subr.bf16.mxu0 0
    %103 = vmatpush1.bf16.msra.mxu0 0
    %104 = vmatprep.subr.bf16.mxu0 0
    %105 = vmatpush1.bf16.msra.mxu0 0
    %106 = vmatprep.subr.bf16.mxu0 0
    %107 = vmatpush1.bf16.msra.mxu0 0
    %108 = vmatprep.subr.bf16.mxu0 0
    %109 = vmatpush1.bf16.msra.mxu0 0
    %110 = vmatprep.subr.bf16.mxu0 0
    %111 = vmatpush1.bf16.msra.mxu0 0
    %112 = vmatprep.subr.bf16.mxu0 0
    %113 = vmatpush1.bf16.msra.mxu0 0
    %114 = vmatprep.subr.bf16.mxu0 0
    %115 = vmatpush1.bf16.msra.mxu0 0
    %116 = vmatprep.subr.bf16.mxu0 0
    %117 = vmatpush1.bf16.msra.mxu0 0
    %118 = vmatprep.subr.bf16.mxu0 0
    %119 = vmatpush1.bf16.msra.mxu0 0
    %120 = vmatprep.mubr.bf16.mxu0 0
    %121 = vmatmul.mubr.bf16.gmra.mrb[0].mxu0 %v86
    %v122 = vpop.f32.mrb[0].mxu0
    %v123 = vadd.f32 %v47, %v122
    %v124 = vpop.f32.mrb[0].mxu0
    %v125 = vadd.f32 %v51, %v124
    %v126 = vpop.f32.mrb[0].mxu0
    %v127 = vpop.f32.mrb[0].mxu0
    %128 = vdwg.mxu0
    %129 = vmatprep.subr.bf16.mxu0 %v79
    %130 = vmatpush1.bf16.msra.mxu0 %v78
    %131 = vmatprep.subr.bf16.mxu0 0
    %132 = vmatpush1.bf16.msra.mxu0 0
    %133 = vmatprep.subr.bf16.mxu0 0
    %134 = vmatpush1.bf16.msra.mxu0 0
    %135 = vmatprep.subr.bf16.mxu0 0
    %136 = vmatpush1.bf16.msra.mxu0 0
    %137 = vmatprep.subr.bf16.mxu0 0
    %138 = vmatpush1.bf16.msra.mxu0 0
    %139 = vmatprep.subr.bf16.mxu0 0
    %140 = vmatpush1.bf16.msra.mxu0 0
    %141 = vmatprep.subr.bf16.mxu0 0
    %142 = vmatpush1.bf16.msra.mxu0 0
    %143 = vmatprep.subr.bf16.mxu0 0
    %144 = vmatpush1.bf16.msra.mxu0 0
    %145 = vmatprep.subr.bf16.mxu0 0
    %146 = vmatpush1.bf16.msra.mxu0 0
    %147 = vmatprep.subr.bf16.mxu0 0
    %148 = vmatpush1.bf16.msra.mxu0 0
    %149 = vmatprep.subr.bf16.mxu0 0
    %150 = vmatpush1.bf16.msra.mxu0 0
    %151 = vmatprep.subr.bf16.mxu0 0
    %152 = vmatpush1.bf16.msra.mxu0 0
    %153 = vmatprep.subr.bf16.mxu0 0
    %154 = vmatpush1.bf16.msra.mxu0 0
    %155 = vmatprep.subr.bf16.mxu0 0
    %156 = vmatpush1.bf16.msra.mxu0 0
    %157 = vmatprep.subr.bf16.mxu0 0
    %158 = vmatpush1.bf16.msra.mxu0 0
    %159 = vmatprep.subr.bf16.mxu0 0
    %160 = vmatpush1.bf16.msra.mxu0 0
    %161 = vmatprep.mubr.bf16.mxu0 0
    %162 = vmatmul.mubr.bf16.gmra.mrb[0].mxu0 %v86
    %v163 = vpop.f32.mrb[0].mxu0
    %v164 = vadd.f32 %v55, %v163
    %v165 = vpop.f32.mrb[0].mxu0
    %v166 = vadd.f32 %v59, %v165
    %v167 = vpop.f32.mrb[0].mxu0
    %v168 = vpop.f32.mrb[0].mxu0
    %169 = vdwg.mxu0
    %v170 = vmax.f32 %v123, 0.0
    %v171 = vmax.f32 %v125, 0.0
    %v172 = vmax.f32 %v164, 0.0
    %v173 = vmax.f32 %v166, 0.0
    %v174 = vpack.c.bf16 %v170, %v170
    %v175 = vpack.c.bf16 %v171, %v171
    %v176 = vpack.c.bf16 %v172, %v172
    %v177 = vpack.c.bf16 %v173, %v173
    %v178 = vld [vmem:[#allocation2] sm:$0xff]
    %v179 = vld [vmem:[#allocation2 + $0x10] sm:$0xff]
    %v180 = vld [vmem:[#allocation2 + $0x20] sm:$0xff]
    %v181 = vld [vmem:[#allocation2 + $0x30] sm:$0xff]
    %v182 = vld [vmem:[#allocation2 + $0x40] sm:$0xff]
    %v183 = vld [vmem:[#allocation2 + $0x50] sm:$0xff]
    %v184 = vld [vmem:[#allocation2 + $0x60] sm:$0xff]
    %v185 = vld [vmem:[#allocation2 + $0x70] sm:$0xff]
    %v186 = vld [vmem:[#allocation2 + $0x80] sm:$0xff]
    %v187 = vld [vmem:[#allocation2 + $0x90] sm:$0xff]
    %v188 = vld [vmem:[#allocation2 + $0xa0] sm:$0xff]
    %v189 = vld [vmem:[#allocation2 + $0xb0] sm:$0xff]
    %v190 = vld [vmem:[#allocation2 + $0xc0] sm:$0xff]
    %v191 = vld [vmem:[#allocation2 + $0xd0] sm:$0xff]
    %v192 = vld [vmem:[#allocation2 + $0xe0] sm:$0xff]
    %v193 = vld [vmem:[#allocation2 + $0xf0] sm:$0xff]
    %v194 = vld [vmem:[#allocation2 + $0x100] sm:$0xff]
    %v195 = vld [vmem:[#allocation2 + $0x110] sm:$0xff]
    %v196 = vld [vmem:[#allocation2 + $0x120] sm:$0xff]
    %v197 = vld [vmem:[#allocation2 + $0x130] sm:$0xff]
    %v198 = vld [vmem:[#allocation2 + $0x140] sm:$0xff]
    %v199 = vld [vmem:[#allocation2 + $0x150] sm:$0xff]
    %v200 = vld [vmem:[#allocation2 + $0x160] sm:$0xff]
    %v201 = vld [vmem:[#allocation2 + $0x170] sm:$0xff]
    %v202 = vld [vmem:[#allocation2 + $0x180] sm:$0xff]
    %v203 = vld [vmem:[#allocation2 + $0x190] sm:$0xff]
    %v204 = vld [vmem:[#allocation2 + $0x1a0] sm:$0xff]
    %v205 = vld [vmem:[#allocation2 + $0x1b0] sm:$0xff]
    %v206 = vld [vmem:[#allocation2 + $0x1c0] sm:$0xff]
    %v207 = vld [vmem:[#allocation2 + $0x1d0] sm:$0xff]
    %v208 = vld [vmem:[#allocation2 + $0x1e0] sm:$0xff]
    %v209 = vld [vmem:[#allocation2 + $0x1f0] sm:$0xff]
    %v210 = vld [vmem:[%s4 + $0x4] sm:$0x3]
    %v212 = vlaneseq
    %v213 = vshrl.u32 %v212, 7
    %v214 = vsub.s32 0, %v213
    %v215 = vrot.slane %v210, %v214
    %v216 = vlaneseq
    %v217 = vshrl.u32 %v216, 7
    %v218 = vsub.s32 1, %v217
    %v219 = vrot.slane %v210, %v218
    %v254 = vunpack.c.l.b16 %v178
    %v255 = vunpack.c.h.b16 %v178
    %v256 = vunpack.c.l.b16 %v179
    %v257 = vunpack.c.h.b16 %v179
    %v258 = vunpack.c.l.b16 %v180
    %v259 = vunpack.c.h.b16 %v180
    %v260 = vunpack.c.l.b16 %v181
    %v261 = vunpack.c.h.b16 %v181
    %v262 = vunpack.c.l.b16 %v182
    %v263 = vunpack.c.h.b16 %v182
    %v264 = vunpack.c.l.b16 %v183
    %v265 = vunpack.c.h.b16 %v183
    %v266 = vunpack.c.l.b16 %v184
    %v267 = vunpack.c.h.b16 %v184
    %v268 = vunpack.c.l.b16 %v185
    %v269 = vunpack.c.h.b16 %v185
    %v270 = vunpack.c.l.b16 %v186
    %v271 = vunpack.c.h.b16 %v186
    %v272 = vunpack.c.l.b16 %v187
    %v273 = vunpack.c.h.b16 %v187
    %v274 = vunpack.c.l.b16 %v188
    %v275 = vunpack.c.h.b16 %v188
    %v276 = vunpack.c.l.b16 %v189
    %v277 = vunpack.c.h.b16 %v189
    %v278 = vunpack.c.l.b16 %v190
    %v279 = vunpack.c.h.b16 %v190
    %v280 = vunpack.c.l.b16 %v191
    %v281 = vunpack.c.h.b16 %v191
    %v282 = vunpack.c.l.b16 %v192
    %v283 = vunpack.c.h.b16 %v192
    %v284 = vunpack.c.l.b16 %v193
    %v285 = vunpack.c.h.b16 %v193
    %v286 = vunpack.c.l.b16 %v194
    %v287 = vunpack.c.h.b16 %v194
    %v288 = vunpack.c.l.b16 %v195
    %v289 = vunpack.c.h.b16 %v195
    %v290 = vunpack.c.l.b16 %v196
    %v291 = vunpack.c.h.b16 %v196
    %v292 = vunpack.c.l.b16 %v197
    %v293 = vunpack.c.h.b16 %v197
    %v294 = vunpack.c.l.b16 %v198
    %v295 = vunpack.c.h.b16 %v198
    %v296 = vunpack.c.l.b16 %v199
    %v297 = vunpack.c.h.b16 %v199
    %v298 = vunpack.c.l.b16 %v200
    %v299 = vunpack.c.h.b16 %v200
    %v300 = vunpack.c.l.b16 %v201
    %v301 = vunpack.c.h.b16 %v201
    %v302 = vunpack.c.l.b16 %v202
    %v303 = vunpack.c.h.b16 %v202
    %v304 = vunpack.c.l.b16 %v203
    %v305 = vunpack.c.h.b16 %v203
    %v306 = vunpack.c.l.b16 %v204
    %v307 = vunpack.c.h.b16 %v204
    %v308 = vunpack.c.l.b16 %v205
    %v309 = vunpack.c.h.b16 %v205
    %v310 = vunpack.c.l.b16 %v206
    %v311 = vunpack.c.h.b16 %v206
    %v312 = vunpack.c.l.b16 %v207
    %v313 = vunpack.c.h.b16 %v207
    %v314 = vunpack.c.l.b16 %v208
    %v315 = vunpack.c.h.b16 %v208
    %v316 = vunpack.c.l.b16 %v209
    %v317 = vunpack.c.h.b16 %v209
    %v318 = vpack.c.b16 %v256, %v254
    %v319 = vpack.c.b16 %v257, %v255
    %v320 = vpack.c.b16 %v260, %v258
    %v321 = vpack.c.b16 %v261, %v259
    %v322 = vpack.c.b16 %v264, %v262
    %v323 = vpack.c.b16 %v265, %v263
    %v324 = vpack.c.b16 %v268, %v266
    %v325 = vpack.c.b16 %v269, %v267
    %v326 = vpack.c.b16 %v272, %v270
    %v327 = vpack.c.b16 %v273, %v271
    %v328 = vpack.c.b16 %v276, %v274
    %v329 = vpack.c.b16 %v277, %v275
    %v330 = vpack.c.b16 %v280, %v278
    %v331 = vpack.c.b16 %v281, %v279
    %v332 = vpack.c.b16 %v284, %v282
    %v333 = vpack.c.b16 %v285, %v283
    %v334 = vpack.c.b16 %v288, %v286
    %v335 = vpack.c.b16 %v289, %v287
    %v336 = vpack.c.b16 %v292, %v290
    %v337 = vpack.c.b16 %v293, %v291
    %v338 = vpack.c.b16 %v296, %v294
    %v339 = vpack.c.b16 %v297, %v295
    %v340 = vpack.c.b16 %v300, %v298
    %v341 = vpack.c.b16 %v301, %v299
    %v342 = vpack.c.b16 %v304, %v302
    %v343 = vpack.c.b16 %v305, %v303
    %v344 = vpack.c.b16 %v308, %v306
    %v345 = vpack.c.b16 %v309, %v307
    %v346 = vpack.c.b16 %v312, %v310
    %v347 = vpack.c.b16 %v313, %v311
    %v348 = vpack.c.b16 %v316, %v314
    %v349 = vpack.c.b16 %v317, %v315
    %382 = vmatprep.subr.bf16.mxu0 %v319
    %383 = vmatpush1.bf16.msra.mxu0 %v318
    %384 = vmatprep.subr.bf16.mxu0 %v321
    %385 = vmatpush1.bf16.msra.mxu0 %v320
    %386 = vmatprep.subr.bf16.mxu0 %v323
    %387 = vmatpush1.bf16.msra.mxu0 %v322
    %388 = vmatprep.subr.bf16.mxu0 %v325
    %389 = vmatpush1.bf16.msra.mxu0 %v324
    %390 = vmatprep.subr.bf16.mxu0 %v327
    %391 = vmatpush1.bf16.msra.mxu0 %v326
    %392 = vmatprep.subr.bf16.mxu0 %v329
    %393 = vmatpush1.bf16.msra.mxu0 %v328
    %394 = vmatprep.subr.bf16.mxu0 %v331
    %395 = vmatpush1.bf16.msra.mxu0 %v330
    %396 = vmatprep.subr.bf16.mxu0 %v333
    %397 = vmatpush1.bf16.msra.mxu0 %v332
    %398 = vmatprep.subr.bf16.mxu0 %v335
    %399 = vmatpush1.bf16.msra.mxu0 %v334
    %400 = vmatprep.subr.bf16.mxu0 %v337
    %401 = vmatpush1.bf16.msra.mxu0 %v336
    %402 = vmatprep.subr.bf16.mxu0 %v339
    %403 = vmatpush1.bf16.msra.mxu0 %v338
    %404 = vmatprep.subr.bf16.mxu0 %v341
    %405 = vmatpush1.bf16.msra.mxu0 %v340
    %406 = vmatprep.subr.bf16.mxu0 %v343
    %407 = vmatpush1.bf16.msra.mxu0 %v342
    %408 = vmatprep.subr.bf16.mxu0 %v345
    %409 = vmatpush1.bf16.msra.mxu0 %v344
    %410 = vmatprep.subr.bf16.mxu0 %v347
    %411 = vmatpush1.bf16.msra.mxu0 %v346
    %412 = vmatprep.subr.bf16.mxu0 %v349
    %413 = vmatpush1.bf16.msra.mxu0 %v348
    %414 = vmatprep.mubr.bf16.mxu0 %v175
    %415 = vmatmul.mubr.bf16.gmra.mrb[0].mxu0 %v174
    %v416 = vpop.f32.mrb[0].mxu0
    %v417 = vadd.f32 %v215, %v416
    %v418 = vpop.f32.mrb[0].mxu0
    %v419 = vadd.f32 %v219, %v418
    %v420 = vpop.f32.mrb[0].mxu0
    %v421 = vpop.f32.mrb[0].mxu0
    %422 = vdwg.mxu0
    %v423 = vld [vmem:[#allocation2 + $0x8] sm:$0xff]
    %v424 = vld [vmem:[#allocation2 + $0x18] sm:$0xff]
    %v425 = vld [vmem:[#allocation2 + $0x28] sm:$0xff]
    %v426 = vld [vmem:[#allocation2 + $0x38] sm:$0xff]
    %v427 = vld [vmem:[#allocation2 + $0x48] sm:$0xff]
    %v428 = vld [vmem:[#allocation2 + $0x58] sm:$0xff]
    %v429 = vld [vmem:[#allocation2 + $0x68] sm:$0xff]
    %v430 = vld [vmem:[#allocation2 + $0x78] sm:$0xff]
    %v431 = vld [vmem:[#allocation2 + $0x88] sm:$0xff]
    %v432 = vld [vmem:[#allocation2 + $0x98] sm:$0xff]
    %v433 = vld [vmem:[#allocation2 + $0xa8] sm:$0xff]
    %v434 = vld [vmem:[#allocation2 + $0xb8] sm:$0xff]
    %v435 = vld [vmem:[#allocation2 + $0xc8] sm:$0xff]
    %v436 = vld [vmem:[#allocation2 + $0xd8] sm:$0xff]
    %v437 = vld [vmem:[#allocation2 + $0xe8] sm:$0xff]
    %v438 = vld [vmem:[#allocation2 + $0xf8] sm:$0xff]
    %v439 = vld [vmem:[#allocation2 + $0x108] sm:$0xff]
    %v440 = vld [vmem:[#allocation2 + $0x118] sm:$0xff]
    %v441 = vld [vmem:[#allocation2 + $0x128] sm:$0xff]
    %v442 = vld [vmem:[#allocation2 + $0x138] sm:$0xff]
    %v443 = vld [vmem:[#allocation2 + $0x148] sm:$0xff]
    %v444 = vld [vmem:[#allocation2 + $0x158] sm:$0xff]
    %v445 = vld [vmem:[#allocation2 + $0x168] sm:$0xff]
    %v446 = vld [vmem:[#allocation2 + $0x178] sm:$0xff]
    %v447 = vld [vmem:[#allocation2 + $0x188] sm:$0xff]
    %v448 = vld [vmem:[#allocation2 + $0x198] sm:$0xff]
    %v449 = vld [vmem:[#allocation2 + $0x1a8] sm:$0xff]
    %v450 = vld [vmem:[#allocation2 + $0x1b8] sm:$0xff]
    %v451 = vld [vmem:[#allocation2 + $0x1c8] sm:$0xff]
    %v452 = vld [vmem:[#allocation2 + $0x1d8] sm:$0xff]
    %v453 = vld [vmem:[#allocation2 + $0x1e8] sm:$0xff]
    %v454 = vld [vmem:[#allocation2 + $0x1f8] sm:$0xff]
    %v455 = vld [vmem:[%s4 + $0x6] sm:$0x3]
    %v457 = vlaneseq
    %v458 = vshrl.u32 %v457, 7
    %v459 = vsub.s32 0, %v458
    %v460 = vrot.slane %v455, %v459
    %v461 = vlaneseq
    %v462 = vshrl.u32 %v461, 7
    %v463 = vsub.s32 1, %v462
    %v464 = vrot.slane %v455, %v463
    %v499 = vunpack.c.l.b16 %v423
    %v500 = vunpack.c.h.b16 %v423
    %v501 = vunpack.c.l.b16 %v424
    %v502 = vunpack.c.h.b16 %v424
    %v503 = vunpack.c.l.b16 %v425
    %v504 = vunpack.c.h.b16 %v425
    %v505 = vunpack.c.l.b16 %v426
    %v506 = vunpack.c.h.b16 %v426
    %v507 = vunpack.c.l.b16 %v427
    %v508 = vunpack.c.h.b16 %v427
    %v509 = vunpack.c.l.b16 %v428
    %v510 = vunpack.c.h.b16 %v428
    %v511 = vunpack.c.l.b16 %v429
    %v512 = vunpack.c.h.b16 %v429
    %v513 = vunpack.c.l.b16 %v430
    %v514 = vunpack.c.h.b16 %v430
    %v515 = vunpack.c.l.b16 %v431
    %v516 = vunpack.c.h.b16 %v431
    %v517 = vunpack.c.l.b16 %v432
    %v518 = vunpack.c.h.b16 %v432
    %v519 = vunpack.c.l.b16 %v433
    %v520 = vunpack.c.h.b16 %v433
    %v521 = vunpack.c.l.b16 %v434
    %v522 = vunpack.c.h.b16 %v434
    %v523 = vunpack.c.l.b16 %v435
    %v524 = vunpack.c.h.b16 %v435
    %v525 = vunpack.c.l.b16 %v436
    %v526 = vunpack.c.h.b16 %v436
    %v527 = vunpack.c.l.b16 %v437
    %v528 = vunpack.c.h.b16 %v437
    %v529 = vunpack.c.l.b16 %v438
    %v530 = vunpack.c.h.b16 %v438
    %v531 = vunpack.c.l.b16 %v439
    %v532 = vunpack.c.h.b16 %v439
    %v533 = vunpack.c.l.b16 %v440
    %v534 = vunpack.c.h.b16 %v440
    %v535 = vunpack.c.l.b16 %v441
    %v536 = vunpack.c.h.b16 %v441
    %v537 = vunpack.c.l.b16 %v442
    %v538 = vunpack.c.h.b16 %v442
    %v539 = vunpack.c.l.b16 %v443
    %v540 = vunpack.c.h.b16 %v443
    %v541 = vunpack.c.l.b16 %v444
    %v542 = vunpack.c.h.b16 %v444
    %v543 = vunpack.c.l.b16 %v445
    %v544 = vunpack.c.h.b16 %v445
    %v545 = vunpack.c.l.b16 %v446
    %v546 = vunpack.c.h.b16 %v446
    %v547 = vunpack.c.l.b16 %v447
    %v548 = vunpack.c.h.b16 %v447
    %v549 = vunpack.c.l.b16 %v448
    %v550 = vunpack.c.h.b16 %v448
    %v551 = vunpack.c.l.b16 %v449
    %v552 = vunpack.c.h.b16 %v449
    %v553 = vunpack.c.l.b16 %v450
    %v554 = vunpack.c.h.b16 %v450
    %v555 = vunpack.c.l.b16 %v451
    %v556 = vunpack.c.h.b16 %v451
    %v557 = vunpack.c.l.b16 %v452
    %v558 = vunpack.c.h.b16 %v452
    %v559 = vunpack.c.l.b16 %v453
    %v560 = vunpack.c.h.b16 %v453
    %v561 = vunpack.c.l.b16 %v454
    %v562 = vunpack.c.h.b16 %v454
    %v563 = vpack.c.b16 %v501, %v499
    %v564 = vpack.c.b16 %v502, %v500
    %v565 = vpack.c.b16 %v505, %v503
    %v566 = vpack.c.b16 %v506, %v504
    %v567 = vpack.c.b16 %v509, %v507
    %v568 = vpack.c.b16 %v510, %v508
    %v569 = vpack.c.b16 %v513, %v511
    %v570 = vpack.c.b16 %v514, %v512
    %v571 = vpack.c.b16 %v517, %v515
    %v572 = vpack.c.b16 %v518, %v516
    %v573 = vpack.c.b16 %v521, %v519
    %v574 = vpack.c.b16 %v522, %v520
    %v575 = vpack.c.b16 %v525, %v523
    %v576 = vpack.c.b16 %v526, %v524
    %v577 = vpack.c.b16 %v529, %v527
    %v578 = vpack.c.b16 %v530, %v528
    %v579 = vpack.c.b16 %v533, %v531
    %v580 = vpack.c.b16 %v534, %v532
    %v581 = vpack.c.b16 %v537, %v535
    %v582 = vpack.c.b16 %v538, %v536
    %v583 = vpack.c.b16 %v541, %v539
    %v584 = vpack.c.b16 %v542, %v540
    %v585 = vpack.c.b16 %v545, %v543
    %v586 = vpack.c.b16 %v546, %v544
    %v587 = vpack.c.b16 %v549, %v547
    %v588 = vpack.c.b16 %v550, %v548
    %v589 = vpack.c.b16 %v553, %v551
    %v590 = vpack.c.b16 %v554, %v552
    %v591 = vpack.c.b16 %v557, %v555
    %v592 = vpack.c.b16 %v558, %v556
    %v593 = vpack.c.b16 %v561, %v559
    %v594 = vpack.c.b16 %v562, %v560
    %627 = vmatprep.subr.bf16.mxu0 %v564
    %628 = vmatpush1.bf16.msra.mxu0 %v563
    %629 = vmatprep.subr.bf16.mxu0 %v566
    %630 = vmatpush1.bf16.msra.mxu0 %v565
    %631 = vmatprep.subr.bf16.mxu0 %v568
    %632 = vmatpush1.bf16.msra.mxu0 %v567
    %633 = vmatprep.subr.bf16.mxu0 %v570
    %634 = vmatpush1.bf16.msra.mxu0 %v569
    %635 = vmatprep.subr.bf16.mxu0 %v572
    %636 = vmatpush1.bf16.msra.mxu0 %v571
    %637 = vmatprep.subr.bf16.mxu0 %v574
    %638 = vmatpush1.bf16.msra.mxu0 %v573
    %639 = vmatprep.subr.bf16.mxu0 %v576
    %640 = vmatpush1.bf16.msra.mxu0 %v575
    %641 = vmatprep.subr.bf16.mxu0 %v578
    %642 = vmatpush1.bf16.msra.mxu0 %v577
    %643 = vmatprep.subr.bf16.mxu0 %v580
    %644 = vmatpush1.bf16.msra.mxu0 %v579
    %645 = vmatprep.subr.bf16.mxu0 %v582
    %646 = vmatpush1.bf16.msra.mxu0 %v581
    %647 = vmatprep.subr.bf16.mxu0 %v584
    %648 = vmatpush1.bf16.msra.mxu0 %v583
    %649 = vmatprep.subr.bf16.mxu0 %v586
    %650 = vmatpush1.bf16.msra.mxu0 %v585
    %651 = vmatprep.subr.bf16.mxu0 %v588
    %652 = vmatpush1.bf16.msra.mxu0 %v587
    %653 = vmatprep.subr.bf16.mxu0 %v590
    %654 = vmatpush1.bf16.msra.mxu0 %v589
    %655 = vmatprep.subr.bf16.mxu0 %v592
    %656 = vmatpush1.bf16.msra.mxu0 %v591
    %657 = vmatprep.subr.bf16.mxu0 %v594
    %658 = vmatpush1.bf16.msra.mxu0 %v593
    %659 = vmatprep.mubr.bf16.mxu0 %v177
    %660 = vmatmul.mubr.bf16.gmra.mrb[0].mxu0 %v176
    %v661 = vpop.f32.mrb[0].mxu0
    %v662 = vadd.f32 %v460, %v661
    %v663 = vpop.f32.mrb[0].mxu0
    %v664 = vadd.f32 %v464, %v663
    %v665 = vpop.f32.mrb[0].mxu0
    %v666 = vpop.f32.mrb[0].mxu0
    %667 = vdwg.mxu0
    %v668 = vmax.f32 %v417, 0.0
    %v669 = vmax.f32 %v419, 0.0
    %v670 = vpack.c.bf16 %v668, %v668
    %v671 = vpack.c.bf16 %v669, %v669
    %v672 = vmax.f32 %v662, 0.0
    %v673 = vmax.f32 %v664, 0.0
    %v674 = vpack.c.bf16 %v672, %v672
    %v675 = vpack.c.bf16 %v673, %v673
    %v676 = vld [vmem:[%s3] sm:$0xf]
    %v677 = vld [vmem:[%s3 + $0x4] sm:$0xf]
    %v678 = vld [vmem:[%s3 + $0x8] sm:$0xf]
    %v679 = vld [vmem:[%s3 + $0xc] sm:$0xf]
    %v680 = vld [vmem:[%s3 + $0x10] sm:$0xf]
    %v681 = vld [vmem:[%s3 + $0x14] sm:$0xf]
    %v682 = vld [vmem:[%s3 + $0x18] sm:$0xf]
    %v683 = vld [vmem:[%s3 + $0x1c] sm:$0xf]
    %v684 = vld [vmem:[%s3 + $0x20] sm:$0xf]
    %v685 = vld [vmem:[%s3 + $0x24] sm:$0xf]
    %v686 = vld [vmem:[%s3 + $0x28] sm:$0xf]
    %v687 = vld [vmem:[%s3 + $0x2c] sm:$0xf]
    %v688 = vld [vmem:[%s3 + $0x30] sm:$0xf]
    %v689 = vld [vmem:[%s3 + $0x34] sm:$0xf]
    %v690 = vld [vmem:[%s3 + $0x38] sm:$0xf]
    %v691 = vld [vmem:[%s3 + $0x3c] sm:$0xf]
    %v692 = vld [vmem:[%s3 + $0x40] sm:$0xf]
    %v693 = vld [vmem:[%s3 + $0x44] sm:$0xf]
    %v694 = vld [vmem:[%s3 + $0x48] sm:$0xf]
    %v695 = vld [vmem:[%s3 + $0x4c] sm:$0xf]
    %v696 = vld [vmem:[%s3 + $0x50] sm:$0xf]
    %v697 = vld [vmem:[%s3 + $0x54] sm:$0xf]
    %v698 = vld [vmem:[%s3 + $0x58] sm:$0xf]
    %v699 = vld [vmem:[%s3 + $0x5c] sm:$0xf]
    %v700 = vld [vmem:[%s3 + $0x60] sm:$0xf]
    %v701 = vld [vmem:[%s3 + $0x64] sm:$0xf]
    %v702 = vld [vmem:[%s3 + $0x68] sm:$0xf]
    %v703 = vld [vmem:[%s3 + $0x6c] sm:$0xf]
    %v704 = vld [vmem:[%s3 + $0x70] sm:$0xf]
    %v705 = vld [vmem:[%s3 + $0x74] sm:$0xf]
    %v706 = vld [vmem:[%s3 + $0x78] sm:$0xf]
    %v707 = vld [vmem:[%s3 + $0x7c] sm:$0xf]
    %v708 = vld [vmem:[%s4 + $0x8] sm:$0x1]
    %v710 = vlaneseq
    %v711 = vshrl.u32 %v710, 7
    %v712 = vsub.s32 0, %v711
    %v713 = vrot.slane %v708, %v712
    %v747 = vunpack.c.l.b16 %v676
    %v748 = vunpack.c.l.b16 %v677
    %v749 = vunpack.c.l.b16 %v678
    %v750 = vunpack.c.l.b16 %v679
    %v751 = vunpack.c.l.b16 %v680
    %v752 = vunpack.c.l.b16 %v681
    %v753 = vunpack.c.l.b16 %v682
    %v754 = vunpack.c.l.b16 %v683
    %v755 = vunpack.c.l.b16 %v684
    %v756 = vunpack.c.l.b16 %v685
    %v757 = vunpack.c.l.b16 %v686
    %v758 = vunpack.c.l.b16 %v687
    %v759 = vunpack.c.l.b16 %v688
    %v760 = vunpack.c.l.b16 %v689
    %v761 = vunpack.c.l.b16 %v690
    %v762 = vunpack.c.l.b16 %v691
    %v763 = vunpack.c.l.b16 %v692
    %v764 = vunpack.c.l.b16 %v693
    %v765 = vunpack.c.l.b16 %v694
    %v766 = vunpack.c.l.b16 %v695
    %v767 = vunpack.c.l.b16 %v696
    %v768 = vunpack.c.l.b16 %v697
    %v769 = vunpack.c.l.b16 %v698
    %v770 = vunpack.c.l.b16 %v699
    %v771 = vunpack.c.l.b16 %v700
    %v772 = vunpack.c.l.b16 %v701
    %v773 = vunpack.c.l.b16 %v702
    %v774 = vunpack.c.l.b16 %v703
    %v775 = vunpack.c.l.b16 %v704
    %v776 = vunpack.c.l.b16 %v705
    %v777 = vunpack.c.l.b16 %v706
    %v778 = vunpack.c.l.b16 %v707
    %v779 = vpack.c.b16 %v748, %v747
    %v780 = vpack.c.b16 %v750, %v749
    %v781 = vpack.c.b16 %v752, %v751
    %v782 = vpack.c.b16 %v754, %v753
    %v783 = vpack.c.b16 %v756, %v755
    %v784 = vpack.c.b16 %v758, %v757
    %v785 = vpack.c.b16 %v760, %v759
    %v786 = vpack.c.b16 %v762, %v761
    %v787 = vpack.c.b16 %v764, %v763
    %v788 = vpack.c.b16 %v766, %v765
    %v789 = vpack.c.b16 %v768, %v767
    %v790 = vpack.c.b16 %v770, %v769
    %v791 = vpack.c.b16 %v772, %v771
    %v792 = vpack.c.b16 %v774, %v773
    %v793 = vpack.c.b16 %v776, %v775
    %v794 = vpack.c.b16 %v778, %v777
    %811 = vmatprep.subr.bf16.mxu0 0
    %812 = vmatpush1.bf16.msra.mxu0 %v779
    %813 = vmatprep.subr.bf16.mxu0 0
    %814 = vmatpush1.bf16.msra.mxu0 %v780
    %815 = vmatprep.subr.bf16.mxu0 0
    %816 = vmatpush1.bf16.msra.mxu0 %v781
    %817 = vmatprep.subr.bf16.mxu0 0
    %818 = vmatpush1.bf16.msra.mxu0 %v782
    %819 = vmatprep.subr.bf16.mxu0 0
    %820 = vmatpush1.bf16.msra.mxu0 %v783
    %821 = vmatprep.subr.bf16.mxu0 0
    %822 = vmatpush1.bf16.msra.mxu0 %v784
    %823 = vmatprep.subr.bf16.mxu0 0
    %824 = vmatpush1.bf16.msra.mxu0 %v785
    %825 = vmatprep.subr.bf16.mxu0 0
    %826 = vmatpush1.bf16.msra.mxu0 %v786
    %827 = vmatprep.subr.bf16.mxu0 0
    %828 = vmatpush1.bf16.msra.mxu0 %v787
    %829 = vmatprep.subr.bf16.mxu0 0
    %830 = vmatpush1.bf16.msra.mxu0 %v788
    %831 = vmatprep.subr.bf16.mxu0 0
    %832 = vmatpush1.bf16.msra.mxu0 %v789
    %833 = vmatprep.subr.bf16.mxu0 0
    %834 = vmatpush1.bf16.msra.mxu0 %v790
    %835 = vmatprep.subr.bf16.mxu0 0
    %836 = vmatpush1.bf16.msra.mxu0 %v791
    %837 = vmatprep.subr.bf16.mxu0 0
    %838 = vmatpush1.bf16.msra.mxu0 %v792
    %839 = vmatprep.subr.bf16.mxu0 0
    %840 = vmatpush1.bf16.msra.mxu0 %v793
    %841 = vmatprep.subr.bf16.mxu0 0
    %842 = vmatpush1.bf16.msra.mxu0 %v794
    %843 = vmatprep.mubr.bf16.mxu0 %v671
    %844 = vmatmul.mubr.bf16.gmra.mrb[0].mxu0 %v670
    %v845 = vpop.f32.mrb[0].mxu0
    %v846 = vadd.f32 %v713, %v845
    %v847 = vpop.f32.mrb[0].mxu0
    %v848 = vpop.f32.mrb[0].mxu0
    %v849 = vpop.f32.mrb[0].mxu0
    %850 = vdwg.mxu0
    %s851 = scalar_lea.vmem %s3, 128
    %v852 = vld [vmem:[%s851] sm:$0xf]
    %v853 = vld [vmem:[%s851 + $0x4] sm:$0xf]
    %v854 = vld [vmem:[%s851 + $0x8] sm:$0xf]
    %v855 = vld [vmem:[%s851 + $0xc] sm:$0xf]
    %v856 = vld [vmem:[%s851 + $0x10] sm:$0xf]
    %v857 = vld [vmem:[%s851 + $0x14] sm:$0xf]
    %v858 = vld [vmem:[%s851 + $0x18] sm:$0xf]
    %v859 = vld [vmem:[%s851 + $0x1c] sm:$0xf]
    %v860 = vld [vmem:[%s851 + $0x20] sm:$0xf]
    %v861 = vld [vmem:[%s851 + $0x24] sm:$0xf]
    %v862 = vld [vmem:[%s851 + $0x28] sm:$0xf]
    %v863 = vld [vmem:[%s851 + $0x2c] sm:$0xf]
    %v864 = vld [vmem:[%s851 + $0x30] sm:$0xf]
    %v865 = vld [vmem:[%s851 + $0x34] sm:$0xf]
    %v866 = vld [vmem:[%s851 + $0x38] sm:$0xf]
    %v867 = vld [vmem:[%s851 + $0x3c] sm:$0xf]
    %v868 = vld [vmem:[%s851 + $0x40] sm:$0xf]
    %v869 = vld [vmem:[%s851 + $0x44] sm:$0xf]
    %v870 = vld [vmem:[%s851 + $0x48] sm:$0xf]
    %v871 = vld [vmem:[%s851 + $0x4c] sm:$0xf]
    %v872 = vld [vmem:[%s851 + $0x50] sm:$0xf]
    %v873 = vld [vmem:[%s851 + $0x54] sm:$0xf]
    %v874 = vld [vmem:[%s851 + $0x58] sm:$0xf]
    %v875 = vld [vmem:[%s851 + $0x5c] sm:$0xf]
    %v876 = vld [vmem:[%s851 + $0x60] sm:$0xf]
    %v877 = vld [vmem:[%s851 + $0x64] sm:$0xf]
    %v878 = vld [vmem:[%s851 + $0x68] sm:$0xf]
    %v879 = vld [vmem:[%s851 + $0x6c] sm:$0xf]
    %v880 = vld [vmem:[%s851 + $0x70] sm:$0xf]
    %v881 = vld [vmem:[%s851 + $0x74] sm:$0xf]
    %v882 = vld [vmem:[%s851 + $0x78] sm:$0xf]
    %v883 = vld [vmem:[%s851 + $0x7c] sm:$0xf]
    %v884 = vld [vmem:[%s4 + $0x9] sm:$0x1]
    %v886 = vlaneseq
    %v887 = vshrl.u32 %v886, 7
    %v888 = vsub.s32 0, %v887
    %v889 = vrot.slane %v884, %v888
    %v923 = vunpack.c.l.b16 %v852
    %v924 = vunpack.c.l.b16 %v853
    %v925 = vunpack.c.l.b16 %v854
    %v926 = vunpack.c.l.b16 %v855
    %v927 = vunpack.c.l.b16 %v856
    %v928 = vunpack.c.l.b16 %v857
    %v929 = vunpack.c.l.b16 %v858
    %v930 = vunpack.c.l.b16 %v859
    %v931 = vunpack.c.l.b16 %v860
    %v932 = vunpack.c.l.b16 %v861
    %v933 = vunpack.c.l.b16 %v862
    %v934 = vunpack.c.l.b16 %v863
    %v935 = vunpack.c.l.b16 %v864
    %v936 = vunpack.c.l.b16 %v865
    %v937 = vunpack.c.l.b16 %v866
    %v938 = vunpack.c.l.b16 %v867
    %v939 = vunpack.c.l.b16 %v868
    %v940 = vunpack.c.l.b16 %v869
    %v941 = vunpack.c.l.b16 %v870
    %v942 = vunpack.c.l.b16 %v871
    %v943 = vunpack.c.l.b16 %v872
    %v944 = vunpack.c.l.b16 %v873
    %v945 = vunpack.c.l.b16 %v874
    %v946 = vunpack.c.l.b16 %v875
    %v947 = vunpack.c.l.b16 %v876
    %v948 = vunpack.c.l.b16 %v877
    %v949 = vunpack.c.l.b16 %v878
    %v950 = vunpack.c.l.b16 %v879
    %v951 = vunpack.c.l.b16 %v880
    %v952 = vunpack.c.l.b16 %v881
    %v953 = vunpack.c.l.b16 %v882
    %v954 = vunpack.c.l.b16 %v883
    %v955 = vpack.c.b16 %v924, %v923
    %v956 = vpack.c.b16 %v926, %v925
    %v957 = vpack.c.b16 %v928, %v927
    %v958 = vpack.c.b16 %v930, %v929
    %v959 = vpack.c.b16 %v932, %v931
    %v960 = vpack.c.b16 %v934, %v933
    %v961 = vpack.c.b16 %v936, %v935
    %v962 = vpack.c.b16 %v938, %v937
    %v963 = vpack.c.b16 %v940, %v939
    %v964 = vpack.c.b16 %v942, %v941
    %v965 = vpack.c.b16 %v944, %v943
    %v966 = vpack.c.b16 %v946, %v945
    %v967 = vpack.c.b16 %v948, %v947
    %v968 = vpack.c.b16 %v950, %v949
    %v969 = vpack.c.b16 %v952, %v951
    %v970 = vpack.c.b16 %v954, %v953
    %987 = vmatprep.subr.bf16.mxu0 0
    %988 = vmatpush1.bf16.msra.mxu0 %v955
    %989 = vmatprep.subr.bf16.mxu0 0
    %990 = vmatpush1.bf16.msra.mxu0 %v956
    %991 = vmatprep.subr.bf16.mxu0 0
    %992 = vmatpush1.bf16.msra.mxu0 %v957
    %993 = vmatprep.subr.bf16.mxu0 0
    %994 = vmatpush1.bf16.msra.mxu0 %v958
    %995 = vmatprep.subr.bf16.mxu0 0
    %996 = vmatpush1.bf16.msra.mxu0 %v959
    %997 = vmatprep.subr.bf16.mxu0 0
    %998 = vmatpush1.bf16.msra.mxu0 %v960
    %999 = vmatprep.subr.bf16.mxu0 0
    %1000 = vmatpush1.bf16.msra.mxu0 %v961
    %1001 = vmatprep.subr.bf16.mxu0 0
    %1002 = vmatpush1.bf16.msra.mxu0 %v962
    %1003 = vmatprep.subr.bf16.mxu0 0
    %1004 = vmatpush1.bf16.msra.mxu0 %v963
    %1005 = vmatprep.subr.bf16.mxu0 0
    %1006 = vmatpush1.bf16.msra.mxu0 %v964
    %1007 = vmatprep.subr.bf16.mxu0 0
    %1008 = vmatpush1.bf16.msra.mxu0 %v965
    %1009 = vmatprep.subr.bf16.mxu0 0
    %1010 = vmatpush1.bf16.msra.mxu0 %v966
    %1011 = vmatprep.subr.bf16.mxu0 0
    %1012 = vmatpush1.bf16.msra.mxu0 %v967
    %1013 = vmatprep.subr.bf16.mxu0 0
    %1014 = vmatpush1.bf16.msra.mxu0 %v968
    %1015 = vmatprep.subr.bf16.mxu0 0
    %1016 = vmatpush1.bf16.msra.mxu0 %v969
    %1017 = vmatprep.subr.bf16.mxu0 0
    %1018 = vmatpush1.bf16.msra.mxu0 %v970
    %1019 = vmatprep.mubr.bf16.mxu0 %v675
    %1020 = vmatmul.mubr.bf16.gmra.mrb[0].mxu0 %v674
    %v1021 = vpop.f32.mrb[0].mxu0
    %v1022 = vadd.f32 %v889, %v1021
    %v1023 = vpop.f32.mrb[0].mxu0
    %v1024 = vpop.f32.mrb[0].mxu0
    %v1025 = vpop.f32.mrb[0].mxu0
    %1026 = vdwg.mxu0
    %v1027 = vmax.f32 %v1022, 0.0
    %vm1028 = vcmask 64512
    %v1029 = vsel %vm1028, %v1027, -inf
    %1030 = vmax.xlane.f32.xlu0 %v1029
    %v1031 = vpop.xlane.xlu0 %1030
    %v1032 = vsub.f32 %v1027, %v1031
    %v1033 = vmul.f32 %v1032, 1.442695
    %v1034 = vpow.pop %v1033
    %v1035 = vsel %vm1028, %v1034, 0.0
    %1036 = vadd.xlane.f32.xlu0 %v1035
    %v1037 = vpop.xlane.xlu0 %1036
    %v1038 = vlog2.pop %v1037
    %v1039 = vmul.f32 %v1038, 0.6931472
    %v1040 = vsub.f32 %v1032, %v1039
    %1042 = vrot.lane.b32.xlu0 %v1040, 8
    %v1043 = vpop.permute.xlu0 %1042
    %1046 = vrot.lane.b32.xlu0 %v1027, 16
    %v1047 = vpop.permute.xlu0 %1046
    %v1049 = vsel %vm1028, %v846, %v1043
    %v1050 = vsel %vm84, %v1049, %v1047
    %vm1051 = vcmask 195584
    %v1052 = vsel %vm1051, %v1050, 0.0
    %1053 = vst [vmem:[#allocation5] sm:$0xff] %v1052
    // Predicated region
    $region26: #{tpu_custom_call.1} parent=1 // pred_check
      _
    $region27: #{tpu_custom_call.1} parent=1 // pred_check_branch
      %1055 = sbr.rel (0) target = $region29
    $region28: #{tpu_custom_call.1} parent=1 // pred_region
      %s1057 = ssub.s32 128, 128
      %1058 = vsyncadd [#allocation4], %s1057
      %s1060 = sshll.u32 [#allocation5], 4
      %s1061 = int_to_ptr.vmem [resolvable:$true] %s1060
      %1063 = dma.vmem_to_hbm [thread:$0]  %s1061, 128, %s5, [#allocation4]
    $region29: #{tpu_custom_call.1} parent=1 // pred_fallthru
      _
    // Predicated region
    $region30: #{tpu_custom_call.1} parent=1 // pred_check
      _
    $region31: #{tpu_custom_call.1} parent=1 // pred_check_branch
      %1065 = sbr.rel (0) target = $region33
    $region32: #{tpu_custom_call.1} parent=1 // pred_region
      %1066 = dma.done [#allocation4], 128
    $region33: #{tpu_custom_call.1} parent=1 // pred_fallthru
      _
    %1067 = vsyncpa [#allocation3], 1
    %1068 = vsyncpa [#allocation4], 1

</llo_original>
